<compile_context>
chip_gen: v7x
topology: tpu7x:2x2x1
jax: 0.10.0
libtpu: 0.0.40
codegen_flags: <defaults>
</compile_context>

<pallas_src>
import functools

import jax
import jax.numpy as jnp
from jax.experimental import pallas as pl
from jax.experimental.pallas import tpu as pltpu


def _basic_layer_kernel(x_ref, w_ref, b_ref, o_ref, *, residual, nb):
    # x_ref: (Nb, Cin, TS)   w_ref: (Cout, Cin)   b_ref: (Cout, 1)
    # o_ref: (Nb, Cout, TS)
    w = w_ref[...]
    b = b_ref[...]
    # Static unroll over the batch block: Nb independent (Cout,Cin)@(Cin,TS)
    # MXU matmuls in ONE grid step (amortizes per-step overhead, keeps the
    # lane axis dense) without any in-kernel axis transpose.
    for n in range(nb):
        x = x_ref[n]                                                   # (Cin, TS)
        y = jnp.dot(w, x, preferred_element_type=jnp.float32)          # (Cout, TS)
        y = y + b                                # per-channel bias, lane-broadcast
        if residual:                             # static (trace-time) branch
            y = y + x                            # identity residual (Cin == Cout)
        o_ref[n] = jnp.maximum(y, 0.0)           # ReLU (f32 elementwise)


def _choose_tiling(N, Cin, Cout, S_pad, itemsize,
                   block_budget_bytes=10 * 1024 * 1024):
    """Pick (Nb batch elements per step, TS lane-tile) for the grid."""
    # Bytes of one batch element's (input + output) blocks.
    per_n = (Cin + Cout) * S_pad * itemsize
    # As many batch elements per step as fit the budget, bounded unroll,
    # but keep >= 2 grid steps when N >= 2 (v7x has 2 TensorCores).
    nb = max(1, min(8, block_budget_bytes // max(per_n, 1)))
    if N >= 2:
        nb = min(nb, max(1, N // 2))
    nb = min(nb, N)
    while N % nb:                      # divisor of N -> no ragged batch blocks
        nb -= 1
    # Lane tile: full padded S if it fits, else largest multiple of 128 that does.
    ts = S_pad
    max_ts = block_budget_bytes // max(nb * (Cin + Cout) * itemsize, 1)
    if ts > max_ts:
        ts = max(128, (max_ts // 128) * 128)
    return nb, ts


def basic_layer(x_nchw, w_fold, b_fold, *, residual):
    """x_nchw: (N, Cin, T, V) f32. w_fold: (Cout, Cin). b_fold: (Cout, 1)."""
    N, Cin, T, V = x_nchw.shape
    Cout = w_fold.shape[0]
    if residual and Cin != Cout:
        raise ValueError("identity residual requires in_channels == out_channels")

    S = T * V
    S_pad = ((S + 127) // 128) * 128           # lane-dense stores (no vst.msk tails)
    x = x_nchw.reshape(N, Cin, S)              # free reshape, no transpose
    if S_pad != S:
        x = jnp.pad(x, ((0, 0), (0, 0), (0, S_pad - S)))

    itemsize = jnp.dtype(jnp.float32).itemsize
    nb, ts = _choose_tiling(N, Cin, Cout, S_pad, itemsize)
    # If only one grid step would remain but there are enough lanes, split S
    # so both v7x TensorCores get work.
    if (N // nb) * pl.cdiv(S_pad, ts) < 2 and ts >= 256:
        ts = ((ts // 2 + 127) // 128) * 128
    grid = (N // nb, pl.cdiv(S_pad, ts))

    cost = pl.CostEstimate(
        flops=2 * N * Cout * Cin * S_pad + 2 * N * Cout * S_pad,
        transcendentals=0,
        bytes_accessed=itemsize * (N * Cin * S_pad + N * Cout * S_pad
                                   + Cout * Cin + Cout),
    )

    kernel = functools.partial(_basic_layer_kernel, residual=residual, nb=nb)
    out = pl.pallas_call(
        kernel,
        out_shape=jax.ShapeDtypeStruct((N, Cout, S_pad), jnp.float32),
        grid_spec=pltpu.PrefetchScalarGridSpec(
            num_scalar_prefetch=0,
            grid=grid,
            in_specs=[
                pl.BlockSpec((nb, Cin, ts), lambda i, j: (i, 0, j)),
                # W'/b' are grid-invariant: one resident VMEM copy, not a
                # double-buffered pipelined block.
                pl.BlockSpec(memory_space=pltpu.MemorySpace.VMEM),
                pl.BlockSpec(memory_space=pltpu.MemorySpace.VMEM),
            ],
            out_specs=pl.BlockSpec((nb, Cout, ts), lambda i, j: (i, 0, j)),
        ),
        compiler_params=pltpu.CompilerParams(
            dimension_semantics=("parallel", "parallel"),
            vmem_limit_bytes=32 * 1024 * 1024),
        cost_estimate=cost,
    )(x, w_fold, b_fold)

    if S_pad != S:
        out = out[:, :, :S]
    return out.reshape(N, Cout, T, V)


def _fold_bn(w_conv, b_conv, gamma, beta, mean, var, eps):
    scale = gamma / jnp.sqrt(var + eps)
    w_fold = w_conv * scale[:, None]                      # (Cout, Cin)
    b_fold = ((b_conv - mean) * scale + beta)[:, None]    # (Cout, 1)
    return w_fold, b_fold


def _reference(x, w_conv, b_conv, gamma, beta, mean, var, eps, residual):
    # Pure-JAX reference with PyTorch eval-mode semantics.
    y = jnp.einsum('oi,nitv->notv', w_conv, x,
                   precision=jax.lax.Precision.HIGHEST)
    y = y + b_conv[None, :, None, None]
    y = (y - mean[None, :, None, None]) / jnp.sqrt(var[None, :, None, None] + eps)
    y = y * gamma[None, :, None, None] + beta[None, :, None, None]
    if residual:
        y = y + x
    return jnp.maximum(y, 0.0)


if __name__ == "__main__":
    # TODO(synk): training-mode BatchNorm (batch-stat computation + running-stat
    # update) is not implemented; eval-mode BN is folded into the conv.
    key = jax.random.PRNGKey(0)
    N, T, V = 2, 16, 16
    eps = 1e-5

    def make_case(k, cin, cout):
        ks = jax.random.split(k, 7)
        x = jax.random.normal(ks[0], (N, cin, T, V), jnp.float32)
        w = jax.random.normal(ks[1], (cout, cin), jnp.float32) * 0.1
        b = jax.random.normal(ks[2], (cout,), jnp.float32) * 0.1
        gamma = 1.0 + 0.1 * jax.random.normal(ks[3], (cout,), jnp.float32)
        beta = 0.1 * jax.random.normal(ks[4], (cout,), jnp.float32)
        mean = 0.1 * jax.random.normal(ks[5], (cout,), jnp.float32)
        var = jax.random.uniform(ks[6], (cout,), jnp.float32, 0.5, 1.5)
        return x, w, b, gamma, beta, mean, var

    k1, k2 = jax.random.split(key)

    # Case 1: residual=True (Identity), in == out channels.
    Cin = Cout = 16
    x, w, b, g, be, mu, va = make_case(k1, Cin, Cout)
    wf, bf = _fold_bn(w, b, g, be, mu, va, eps)
    out = jax.block_until_ready(basic_layer(x, wf, bf, residual=True))
    ref = _reference(x, w, b, g, be, mu, va, eps, residual=True)
    assert out.shape == (N, Cout, T, V)
    assert jnp.allclose(out, ref, atol=5e-4, rtol=5e-4), (
        float(jnp.max(jnp.abs(out - ref))))

    # Case 2: residual=False (Zero_Layer), channel expansion 16 -> 32.
    Cin, Cout = 16, 32
    x, w, b, g, be, mu, va = make_case(k2, Cin, Cout)
    wf, bf = _fold_bn(w, b, g, be, mu, va, eps)
    out = jax.block_until_ready(basic_layer(x, wf, bf, residual=False))
    ref = _reference(x, w, b, g, be, mu, va, eps, residual=False)
    assert out.shape == (N, Cout, T, V)
    assert jnp.allclose(out, ref, atol=5e-4, rtol=5e-4), (
        float(jnp.max(jnp.abs(out - ref))))

    print("KERNEL_OK")
</pallas_src>

<mosaic_0001>
module attributes {stable_mosaic.version = 11 : i64} {
  func.func @_basic_layer_kernel(%arg0: i32, %arg1: i32, %arg2: memref<1x16x256xf32, #tpu.memory_space<vmem>>, %arg3: memref<16x16xf32, #tpu.memory_space<vmem>>, %arg4: memref<16x1xf32, #tpu.memory_space<vmem>>, %arg5: memref<1x16x256xf32, #tpu.memory_space<vmem>>) attributes {dimension_semantics = [#tpu.dimension_semantics<parallel>, #tpu.dimension_semantics<parallel>], iteration_bounds = array<i64: 2, 1>, scalar_prefetch = 0 : i64, scratch_operands = 0 : i64, tpu.core_type = #tpu.core_type<tc>, window_params = [{transform_indices = @transform_0, window_bounds = array<i64: 1, 16, 256>}, {pipeline_mode = #tpu.pipeline_mode<synchronous>, transform_indices = @transform_1, window_bounds = array<i64: 16, 16>}, {pipeline_mode = #tpu.pipeline_mode<synchronous>, transform_indices = @transform_2, window_bounds = array<i64: 16, 1>}, {transform_indices = @transform_3, window_bounds = array<i64: 1, 16, 256>}]} {
    %c0 = arith.constant 0 : index
    %c0_0 = arith.constant 0 : index
    %0 = vector.load %arg3[%c0, %c0_0] : memref<16x16xf32, #tpu.memory_space<vmem>>, vector<16x16xf32>
    %c0_1 = arith.constant 0 : index
    %c0_2 = arith.constant 0 : index
    %1 = vector.load %arg4[%c0_1, %c0_2] : memref<16x1xf32, #tpu.memory_space<vmem>>, vector<16x1xf32>
    %c0_3 = arith.constant 0 : index
    %c0_4 = arith.constant 0 : index
    %c0_5 = arith.constant 0 : index
    %2 = vector.load %arg2[%c0_3, %c0_4, %c0_5] : memref<1x16x256xf32, #tpu.memory_space<vmem>>, vector<1x16x256xf32>
    %3 = vector.shape_cast %2 : vector<1x16x256xf32> to vector<16x256xf32>
    %cst = arith.constant dense<0.000000e+00> : vector<16x256xf32>
    %4 = tpu.matmul %0, %3, %cst {dimension_numbers = #tpu.dot_dimension_numbers<[1], [0], [0], [1], [0, 0, 1, 1], [], []>} : vector<16x16xf32>, vector<16x256xf32>, vector<16x256xf32> -> vector<16x256xf32>
    %5 = vector.broadcast %1 : vector<16x1xf32> to vector<16x256xf32>
    %6 = arith.addf %4, %5 : vector<16x256xf32>
    %7 = arith.addf %6, %3 : vector<16x256xf32>
    %cst_6 = arith.constant 0.000000e+00 : f32
    %8 = vector.broadcast %cst_6 : f32 to vector<16x256xf32>
    %9 = arith.maximumf %7, %8 : vector<16x256xf32>
    %c0_7 = arith.constant 0 : index
    %c0_8 = arith.constant 0 : index
    %c0_9 = arith.constant 0 : index
    %10 = vector.load %arg5[%c0_7, %c0_8, %c0_9] : memref<1x16x256xf32, #tpu.memory_space<vmem>>, vector<1x16x256xf32>
    %11 = vector.shape_cast %10 : vector<1x16x256xf32> to vector<16x256xf32>
    %12 = vector.shape_cast %9 : vector<16x256xf32> to vector<1x16x256xf32>
    tpu.vector_store %arg5[%c0_7, %c0_8, %c0_9], %12 {strides = array<i32>} : memref<1x16x256xf32, #tpu.memory_space<vmem>>, vector<1x16x256xf32>,
    return
  }
  func.func @transform_0(%arg0: i32, %arg1: i32) -> (i32, i32, i32) {
    %c0_i32 = arith.constant 0 : i32
    %c0_i32_0 = arith.constant 0 : i32
    return %arg0, %c0_i32, %arg1 : i32, i32, i32
  }
  func.func @transform_1(%arg0: i32, %arg1: i32) -> (i32, i32) {
    %c0_i32 = arith.constant 0 : i32
    %c0_i32_0 = arith.constant 0 : i32
    %c0_i32_1 = arith.constant 0 : i32
    return %c0_i32, %c0_i32_0 : i32, i32
  }
  func.func @transform_2(%arg0: i32, %arg1: i32) -> (i32, i32) {
    %c0_i32 = arith.constant 0 : i32
    %c0_i32_0 = arith.constant 0 : i32
    %c0_i32_1 = arith.constant 0 : i32
    return %c0_i32, %c0_i32_0 : i32, i32
  }
  func.func @transform_3(%arg0: i32, %arg1: i32) -> (i32, i32, i32) {
    %c0_i32 = arith.constant 0 : i32
    %c0_i32_0 = arith.constant 0 : i32
    return %arg0, %c0_i32, %arg1 : i32, i32, i32
  }
}

</mosaic_0001>

<llo_original>
// kernel: tpu_custom_call.1
$region0: #{tpu_custom_call.1}
  #allocation0 [shape = 'u32[]', space=smem, size = 0x4, offset = 0x4, fixed_abs, tag = 'smem constant byte address 0x4 - core index']
  #allocation1 [shape = 'u32[144,128]{1,0:T(1,128)}', space=vmem, size = 0x12000, scoped, tag = 'internal scratch']
  %s0 = inlined_call_operand.hbm [shape: f32[2,16,256], index: 0, kind: input, shape index: {}]
  %s1 = inlined_call_operand.vmem [shape: f32[16,16], index: 1, kind: input, shape index: {}]
  %s2 = inlined_call_operand.vmem [shape: f32[16,1], index: 2, kind: input, shape index: {}]
  %s3 = inlined_call_operand.hbm [shape: f32[2,16,256], index: 3, kind: output, shape index: {}]
  %s4 = sld [smem:[#allocation0]]
  $region49: #{tpu_custom_call.1} parent=0
    _
  %s6 = ssub.s32 1, %s4
  %s7 = scalar_select 0, %s6, %s4
  $region1: #{tpu_custom_call.1} parent=0
    #allocation2 [shape = 'u8[32768]{0}', space=vmem, size = 0x8000, scoped, tag = 'input window, operand 0']
    #allocation3 [shape = 's32[2]{0}', space=sflag, size = 0x8, scoped, tag = 'scoped memory for tpu_custom_call.1']
    #allocation4 [shape = 's32[2]{0}', space=sflag, size = 0x8, scoped, tag = 'scoped memory for tpu_custom_call.1']
    #allocation5 [shape = 'u8[32768]{0}', space=vmem, size = 0x8000, scoped, tag = 'output window, operand 0']
    %8 = vsyncpa [#allocation3], 0
    %s9 = scalar_lea.sflag [#allocation3], 1
    %10 = vsyncpa %s9, 0
    %11 = vsyncpa [#allocation4], 0
    %s12 = scalar_lea.sflag [#allocation4], 1
    %13 = vsyncpa %s12, 0
    loop: start=0, step=1, limit=4
    $region2: #{tpu_custom_call.1} parent=1 // loop_pre_header
      _
    $region3: #{tpu_custom_call.1} parent=1 // loop_header
      %s15 = sphi 0, %s19
      %p16 = scmp.ge.s32.totalorder %s15, 4
      %s22 = sphi 0, %s34
      %s23 = sphi 0, %s30
      %s24 = sphi 0, %s22
      %s25 = sphi 0, %s23
      %s26 = sphi 0, %s24
      %s27 = sphi 0, %s25
      %s39 = sphi 0, %s41
      %s42 = sphi 0, %s39
      %s43 = sphi 0, %s42
      %s59 = sphi 0, %s43
      %s63 = sphi 0, %s63
      %s65 = sphi 0, %s63
      %s66 = sphi 0, %s65
      %s80 = sphi 0, %s66
      %s84 = sphi 0, %s84
      %s86 = sphi 0, %s84
      %s87 = sphi 0, %s86
      %s101 = sphi 0, %s87
      %s109 = sphi 0, %s111
      %s112 = sphi 0, %s109
      %s113 = sphi 0, %s112
      %s129 = sphi 0, %s113
    $region4: #{tpu_custom_call.1} parent=1 // loop_header_branch
      %18 = sbr.rel (%p16) target = $region8
    $region5: #{tpu_custom_call.1} parent=1 // loop_body
      %s20 = ssub.s32 %s15, 1
      %s21 = ssub.s32 %s15, 2
      %s28 = sadd.s32 1, %s23
      %p29 = scmp.ge.s32.totalorder %s28, 1
      %s30 = scalar_select %p29, 0, %s28
      %s31 = sadd.s32 1, %s22
      %s32 = scalar_select %p29, %s31, %s22
      %p33 = scmp.ge.s32.totalorder %s32, 2
      %s34 = scalar_select %p33, 0, %s32
      %s35 = ssub.s32 %s22, %s34
      %s36 = ssub.s32 %s23, %s30
      %s37 = sor.u32 %s35, %s36
      %p38 = scmp.eq.s32.totalorder %s37, 0
      %s40 = sadd.s32 %s39, 1
      %s41 = scalar_select %p38, %s39, %s40
      %p44 = pneg %p38
      %p45 = scmp.eq.s32.totalorder %s15, 1
      %p46 = por %p44, %p45
      %p47 = scmp.ne.s32.totalorder %s39, %s42
      %p48 = scmp.eq.s32.totalorder %s15, 0
      %p49 = por %p47, %p48
      %p50 = scmp.ne.s32.totalorder %s39, %s42
      %p51 = scmp.eq.s32.totalorder %s20, 1
      %p52 = por %p50, %p51
      %p53 = scmp.ne.s32.totalorder %s42, %s43
      %p54 = scmp.eq.s32.totalorder %s20, 0
      %p55 = por %p53, %p54
      %p56 = scmp.ne.s32.totalorder %s42, %s43
      %p57 = scmp.eq.s32.totalorder %s21, 1
      %p58 = por %p56, %p57
      %p60 = scmp.ne.s32.totalorder %s43, %s59
      %p61 = scmp.eq.s32.totalorder %s21, 0
      %p62 = por %p60, %p61
      %s64 = sadd.s32 %s63, 1
      %p67 = scmp.eq.s32.totalorder %s15, 1
      %p68 = scmp.ne.s32.totalorder %s63, %s65
      %p69 = scmp.eq.s32.totalorder %s15, 0
      %p70 = por %p68, %p69
      %p71 = scmp.ne.s32.totalorder %s63, %s65
      %p72 = scmp.eq.s32.totalorder %s20, 1
      %p73 = por %p71, %p72
      %p74 = scmp.ne.s32.totalorder %s65, %s66
      %p75 = scmp.eq.s32.totalorder %s20, 0
      %p76 = por %p74, %p75
      %p77 = scmp.ne.s32.totalorder %s65, %s66
      %p78 = scmp.eq.s32.totalorder %s21, 1
      %p79 = por %p77, %p78
      %p81 = scmp.ne.s32.totalorder %s66, %s80
      %p82 = scmp.eq.s32.totalorder %s21, 0
      %p83 = por %p81, %p82
      %s85 = sadd.s32 %s84, 1
      %p88 = scmp.eq.s32.totalorder %s15, 1
      %p89 = scmp.ne.s32.totalorder %s84, %s86
      %p90 = scmp.eq.s32.totalorder %s15, 0
      %p91 = por %p89, %p90
      %p92 = scmp.ne.s32.totalorder %s84, %s86
      %p93 = scmp.eq.s32.totalorder %s20, 1
      %p94 = por %p92, %p93
      %p95 = scmp.ne.s32.totalorder %s86, %s87
      %p96 = scmp.eq.s32.totalorder %s20, 0
      %p97 = por %p95, %p96
      %p98 = scmp.ne.s32.totalorder %s86, %s87
      %p99 = scmp.eq.s32.totalorder %s21, 1
      %p100 = por %p98, %p99
      %p102 = scmp.ne.s32.totalorder %s87, %s101
      %p103 = scmp.eq.s32.totalorder %s21, 0
      %p104 = por %p102, %p103
      %s105 = ssub.s32 %s22, %s34
      %s106 = ssub.s32 %s23, %s30
      %s107 = sor.u32 %s105, %s106
      %p108 = scmp.eq.s32.totalorder %s107, 0
      %s110 = sadd.s32 %s109, 1
      %s111 = scalar_select %p108, %s109, %s110
      %p114 = pneg %p108
      %p115 = scmp.eq.s32.totalorder %s15, 1
      %p116 = por %p114, %p115
      %p117 = scmp.ne.s32.totalorder %s109, %s112
      %p118 = scmp.eq.s32.totalorder %s15, 0
      %p119 = por %p117, %p118
      %p120 = scmp.ne.s32.totalorder %s109, %s112
      %p121 = scmp.eq.s32.totalorder %s20, 1
      %p122 = por %p120, %p121
      %p123 = scmp.ne.s32.totalorder %s112, %s113
      %p124 = scmp.eq.s32.totalorder %s20, 0
      %p125 = por %p123, %p124
      %p126 = scmp.ne.s32.totalorder %s112, %s113
      %p127 = scmp.eq.s32.totalorder %s21, 1
      %p128 = por %p126, %p127
      %p130 = scmp.ne.s32.totalorder %s113, %s129
      %p131 = scmp.eq.s32.totalorder %s21, 0
      %p132 = por %p130, %p131
      %p133 = scmp.le.s32.totalorder 1, %s15
      %p134 = scmp.lt.s32.totalorder %s15, 3
      %p135 = pnand %p133, %p134
      %p136 = pneg %p135
      // Predicated region
      $region9: #{tpu_custom_call.1} parent=5 // pred_check
        _
      $region10: #{tpu_custom_call.1} parent=5 // pred_check_branch
        %138 = sbr.rel (%p135) target = $region12
      $region11: #{tpu_custom_call.1} parent=5 // pred_region
        %s139 = ssub.s32 %s15, 1
        // Predicated region
        $region13: #{tpu_custom_call.1} parent=11 // pred_check
          %p140 = pneg %p76
        $region14: #{tpu_custom_call.1} parent=11 // pred_check_branch
          %142 = sbr.rel (%p140) target = $region16
        $region15: #{tpu_custom_call.1} parent=11 // pred_region
          _
        $region16: #{tpu_custom_call.1} parent=11 // pred_fallthru
          _
        // Predicated region
        $region17: #{tpu_custom_call.1} parent=11 // pred_check
          %p143 = pneg %p97
        $region18: #{tpu_custom_call.1} parent=11 // pred_check_branch
          %145 = sbr.rel (%p143) target = $region20
        $region19: #{tpu_custom_call.1} parent=11 // pred_region
          _
        $region20: #{tpu_custom_call.1} parent=11 // pred_fallthru
          _
      $region12: #{tpu_custom_call.1} parent=5 // pred_fallthru
        _
      %p146 = scmp.lt.s32.totalorder %s15, 2
      // Predicated region
      $region21: #{tpu_custom_call.1} parent=5 // pred_check
        %p147 = pneg %p146
      $region22: #{tpu_custom_call.1} parent=5 // pred_check_branch
        %149 = sbr.rel (%p147) target = $region24
      $region23: #{tpu_custom_call.1} parent=5 // pred_region
        // Predicated region
        $region25: #{tpu_custom_call.1} parent=23 // pred_check
          %p150 = pneg %p49
        $region26: #{tpu_custom_call.1} parent=23 // pred_check_branch
          %152 = sbr.rel (%p150) target = $region28
        $region27: #{tpu_custom_call.1} parent=23 // pred_region
          %s153 = sand.u32 %s39, 1
          %s154 = scalar_lea.sflag [#allocation3], %s153
          %s155 = sand.u32 %s39, 1
          %s156 = smul.addr %s155, 32
          %s157 = scalar_lea.vmem [#allocation2], %s156
          %s158 = smul.u32 2, %s23
          %s160 = ssub.s32 512, 512
          %161 = vsyncadd %s154, %s160
          %s162 = smul.addr %s22, 4
          %s163 = sadd.s32 %s158, %s162
          %s164 = smul.addr %s163, 128
          %s165 = scalar_lea.hbm %s0, %s164
          %s166 = sshll.u32 %s157, 4
          %s167 = int_to_ptr.vmem [resolvable:$true] %s166
          %172 = dma.hbm_to_vmem [thread:$0]  %s165, 512, %s167, %s154, 256, 256, 16
        $region28: #{tpu_custom_call.1} parent=23 // pred_fallthru
          _
      $region24: #{tpu_custom_call.1} parent=5 // pred_fallthru
        _
      %p173 = scmp.le.s32.totalorder 1, %s15
      %p174 = scmp.lt.s32.totalorder %s15, 3
      %p175 = pnand %p173, %p174
      %p176 = pneg %p175
      // Predicated region
      $region29: #{tpu_custom_call.1} parent=5 // pred_check
        _
      $region30: #{tpu_custom_call.1} parent=5 // pred_check_branch
        %178 = sbr.rel (%p175) target = $region32
      $region31: #{tpu_custom_call.1} parent=5 // pred_region
        %s179 = ssub.s32 %s15, 1
        %s180 = sand.u32 %s42, 1
        %s181 = scalar_lea.sflag [#allocation3], %s180
        %s182 = sand.u32 %s42, 1
        %s183 = smul.addr %s182, 32
        %s184 = scalar_lea.vmem [#allocation2], %s183
        // Predicated region
        $region33: #{tpu_custom_call.1} parent=31 // pred_check
          %p185 = pneg %p55
        $region34: #{tpu_custom_call.1} parent=31 // pred_check_branch
          %187 = sbr.rel (%p185) target = $region36
        $region35: #{tpu_custom_call.1} parent=31 // pred_region
          %188 = dma.done %s181, 512
        $region36: #{tpu_custom_call.1} parent=31 // pred_fallthru
          _
        %s189 = sand.u32 %s42, 1
        %s190 = scalar_lea.sflag [#allocation3], %s189
        %s191 = sand.u32 %s42, 1
        %s192 = smul.addr %s191, 32
        %s193 = scalar_lea.vmem [#allocation2], %s192
        %p194 = pneg %p55
        %p195 = pneg %p52
        %p196 = pneg %p76
        %p197 = pneg %p73
        %p198 = pneg %p97
        %p199 = pneg %p94
        %p200 = pneg %p125
        %p201 = pneg %p122
        %s202 = sand.u32 %s112, 1
        %s203 = scalar_lea.sflag [#allocation4], %s202
        %s204 = sand.u32 %s112, 1
        %s205 = smul.addr %s204, 32
        %s206 = scalar_lea.vmem [#allocation5], %s205
        %s207 = smul.u32 2, %s25
        %s208 = smul.u32 2, %s25
        %v209 = vld [vmem:[%s1] sm:$0xff]
        %v210 = vld [vmem:[%s1 + $0x8] sm:$0xff]
        %v211 = vld [vmem:[%s2] sm:$0xff]
        %v212 = vld [vmem:[%s2 + $0x8] sm:$0xff]
        %v213 = vld [vmem:[%s184] sm:$0xff]
        %v214 = vld [vmem:[%s184 + $0x8] sm:$0xff]
        %v215 = vld [vmem:[%s184 + $0x10] sm:$0xff]
        %v216 = vld [vmem:[%s184 + $0x18] sm:$0xff]
        %218 = vset.pattern.permute.xlu0 0
        %219 = vperm.xlu0 %218, %v211
        %v220 = vpop.permute.xlu0 %219
        %223 = vset.pattern.permute.xlu0 0
        %224 = vperm.xlu0 %223, %v212
        %v225 = vpop.permute.xlu0 %224
        %vm227 = vcmask 130048
        %v229 = vsel %vm227, %v209, 0
        %v232 = vsel %vm227, %v210, 0
        %234 = vmatprep.subr.mxu0 %v214
        %235 = vmatpush1.msra.mxu0 %v213
        %236 = vmatprep.subr.mxu0 %v216
        %237 = vmatpush1.msra.mxu0 %v215
        %238 = vmatprep.subr.mxu0 0.0
        %239 = vmatpush1.msra.mxu0 0.0
        %240 = vmatprep.subr.mxu0 0.0
        %241 = vmatpush1.msra.mxu0 0.0
        %242 = vmatprep.subr.mxu0 0.0
        %243 = vmatpush1.msra.mxu0 0.0
        %244 = vmatprep.subr.mxu0 0.0
        %245 = vmatpush1.msra.mxu0 0.0
        %246 = vmatprep.subr.mxu0 0.0
        %247 = vmatpush1.msra.mxu0 0.0
        %248 = vmatprep.subr.mxu0 0.0
        %249 = vmatpush1.msra.mxu0 0.0
        %250 = vmatprep.subr.mxu0 0.0
        %251 = vmatpush1.msra.mxu0 0.0
        %252 = vmatprep.subr.mxu0 0.0
        %253 = vmatpush1.msra.mxu0 0.0
        %254 = vmatprep.subr.mxu0 0.0
        %255 = vmatpush1.msra.mxu0 0.0
        %256 = vmatprep.subr.mxu0 0.0
        %257 = vmatpush1.msra.mxu0 0.0
        %258 = vmatprep.subr.mxu0 0.0
        %259 = vmatpush1.msra.mxu0 0.0
        %260 = vmatprep.subr.mxu0 0.0
        %261 = vmatpush1.msra.mxu0 0.0
        %262 = vmatprep.subr.mxu0 0.0
        %263 = vmatpush1.msra.mxu0 0.0
        %264 = vmatprep.subr.mxu0 0.0
        %265 = vmatpush1.msra.mxu0 0.0
        %266 = vmatprep.subr.mxu0 0.0
        %267 = vmatpush1.msra.mxu0 0.0
        %268 = vmatprep.subr.mxu0 0.0
        %269 = vmatpush1.msra.mxu0 0.0
        %270 = vmatprep.subr.mxu0 0.0
        %271 = vmatpush1.msra.mxu0 0.0
        %272 = vmatprep.subr.mxu0 0.0
        %273 = vmatpush1.msra.mxu0 0.0
        %274 = vmatprep.subr.mxu0 0.0
        %275 = vmatpush1.msra.mxu0 0.0
        %276 = vmatprep.subr.mxu0 0.0
        %277 = vmatpush1.msra.mxu0 0.0
        %278 = vmatprep.subr.mxu0 0.0
        %279 = vmatpush1.msra.mxu0 0.0
        %280 = vmatprep.subr.mxu0 0.0
        %281 = vmatpush1.msra.mxu0 0.0
        %282 = vmatprep.subr.mxu0 0.0
        %283 = vmatpush1.msra.mxu0 0.0
        %284 = vmatprep.subr.mxu0 0.0
        %285 = vmatpush1.msra.mxu0 0.0
        %286 = vmatprep.subr.mxu0 0.0
        %287 = vmatpush1.msra.mxu0 0.0
        %288 = vmatprep.subr.mxu0 0.0
        %289 = vmatpush1.msra.mxu0 0.0
        %290 = vmatprep.subr.mxu0 0.0
        %291 = vmatpush1.msra.mxu0 0.0
        %292 = vmatprep.subr.mxu0 0.0
        %293 = vmatpush1.msra.mxu0 0.0
        %294 = vmatprep.subr.mxu0 0.0
        %295 = vmatpush1.msra.mxu0 0.0
        %296 = vmatprep.subr.mxu0 0.0
        %297 = vmatpush1.msra.mxu0 0.0
        %298 = vmatprep.mubr.f32.mxu0 0.0
        %299 = vmatmul.mubr.f32.gmra.mrb[0].mxu0 %v229
        %v300 = vpop.f32.mrb[0].mxu0
        %v301 = vadd.f32 %v220, %v300
        %v302 = vpop.f32.mrb[0].mxu0
        %v303 = vadd.f32 %v220, %v302
        %304 = vmatprep.mubr.f32.mxu0 0.0
        %305 = vmatmul.mubr.f32.gmra.mrb[0].mxu0 %v232
        %v306 = vpop.f32.mrb[0].mxu0
        %v307 = vadd.f32 %v225, %v306
        %v308 = vpop.f32.mrb[0].mxu0
        %v309 = vadd.f32 %v225, %v308
        %310 = vdwg.mxu0
        %v311 = vadd.f32 %v301, %v213
        %v312 = vadd.f32 %v303, %v214
        %v313 = vadd.f32 %v307, %v215
        %v314 = vadd.f32 %v309, %v216
        %v315 = vmax.f32 %v311, 0.0
        %v316 = vmax.f32 %v312, 0.0
        %v317 = vmax.f32 %v313, 0.0
        %v318 = vmax.f32 %v314, 0.0
        %319 = vst [vmem:[%s206] sm:$0xff] %v315
        %320 = vst [vmem:[%s206 + $0x8] sm:$0xff] %v316
        %321 = vst [vmem:[%s206 + $0x10] sm:$0xff] %v317
        %322 = vst [vmem:[%s206 + $0x18] sm:$0xff] %v318
        %s323 = sand.u32 %s112, 1
        %s324 = scalar_lea.sflag [#allocation4], %s323
        %s325 = sand.u32 %s112, 1
        %s326 = smul.addr %s325, 32
        %s327 = scalar_lea.vmem [#allocation5], %s326
        // Predicated region
        $region37: #{tpu_custom_call.1} parent=31 // pred_check
          %p328 = pneg %p122
        $region38: #{tpu_custom_call.1} parent=31 // pred_check_branch
          %330 = sbr.rel (%p328) target = $region40
        $region39: #{tpu_custom_call.1} parent=31 // pred_region
          %s331 = smul.u32 2, %s25
          %s333 = ssub.s32 512, 512
          %334 = vsyncadd %s324, %s333
          %s335 = smul.addr %s24, 4
          %s336 = sadd.s32 %s331, %s335
          %s337 = smul.addr %s336, 128
          %s338 = scalar_lea.hbm %s3, %s337
          %s339 = sshll.u32 %s327, 4
          %s340 = int_to_ptr.vmem [resolvable:$true] %s339
          %345 = dma.vmem_to_hbm [thread:$0]  %s340, 512, %s338, %s324, 256, 256, 16
        $region40: #{tpu_custom_call.1} parent=31 // pred_fallthru
          _
      $region32: #{tpu_custom_call.1} parent=5 // pred_fallthru
        _
      %p346 = scmp.le.s32.totalorder 2, %s15
      // Predicated region
      $region41: #{tpu_custom_call.1} parent=5 // pred_check
        %p347 = pneg %p346
      $region42: #{tpu_custom_call.1} parent=5 // pred_check_branch
        %349 = sbr.rel (%p347) target = $region44
      $region43: #{tpu_custom_call.1} parent=5 // pred_region
        %s350 = ssub.s32 %s15, 2
        // Predicated region
        $region45: #{tpu_custom_call.1} parent=43 // pred_check
          %p351 = pneg %p128
        $region46: #{tpu_custom_call.1} parent=43 // pred_check_branch
          %353 = sbr.rel (%p351) target = $region48
        $region47: #{tpu_custom_call.1} parent=43 // pred_region
          %s354 = sand.u32 %s113, 1
          %s355 = scalar_lea.sflag [#allocation4], %s354
          %s356 = sand.u32 %s113, 1
          %s357 = smul.addr %s356, 32
          %s358 = scalar_lea.vmem [#allocation5], %s357
          %359 = dma.done %s355, 512
        $region48: #{tpu_custom_call.1} parent=43 // pred_fallthru
          _
      $region44: #{tpu_custom_call.1} parent=5 // pred_fallthru
        _
    $region6: #{tpu_custom_call.1} parent=1 // loop_footer
      %s19 = sadd.s32 1, %s15
    $region7: #{tpu_custom_call.1} parent=1 // loop_footer_branch
      %14 = sbr.rel target = $region3
    $region8: #{tpu_custom_call.1} parent=1 // loop_exit
      _
    %360 = vsyncpa [#allocation3], 1
    %s361 = scalar_lea.sflag [#allocation3], 1
    %362 = vsyncpa %s361, 1
    %363 = vsyncpa [#allocation4], 1
    %s364 = scalar_lea.sflag [#allocation4], 1
    %365 = vsyncpa %s364, 1

</llo_original>
